<compile_context>
chip_gen: v5e
topology: v5e:2x2
jax: 0.10.0
libtpu: 0.0.40
codegen_flags: <defaults>
</compile_context>

<pallas_src>
import jax
import jax.numpy as jnp
from jax.experimental import pallas as pl
from jax.experimental.pallas import tpu as pltpu


def autoencoder_kernel(x_ref, w1_ref, b1_ref, w2_ref, b2_ref,
                       w3_ref, b3_ref, w4_ref, b4_ref,
                       feat_ref, enc_ref, dec_ref):
    x = x_ref[...]                                             # (TB, In)

    # encoder: Linear(In, H) + Tanh  (MXU matmul, f32 accumulate; tanh on EUP)
    feature = jnp.tanh(
        jnp.dot(x, w1_ref[...], preferred_element_type=jnp.float32)
        + b1_ref[...]
    )                                                          # (TB, H)

    # encoder2: Linear(H, 1); bias is a scalar read from SMEM
    encoded = (
        jnp.dot(feature, w2_ref[...], preferred_element_type=jnp.float32)
        + b2_ref[0, 0]
    )                                                          # (TB, 1)

    # decoder[0..1]: Linear(1, H) + Tanh — K=1 matmul expressed as a VPU broadcast
    h = jnp.tanh(encoded * w3_ref[...] + b3_ref[...])          # (TB,1)*(1,H) -> (TB,H)

    # decoder[2]: Linear(H, Out)
    decoded = (
        jnp.dot(h, w4_ref[...], preferred_element_type=jnp.float32)
        + b4_ref[...]
    )                                                          # (TB, Out)

    feat_ref[...] = feature
    enc_ref[...] = encoded
    dec_ref[...] = decoded


def autoencoder_forward(x, params, *, tb=1024):
    """x: (B, input_size) float32. params: dict of weights/biases (see init_params)."""
    B, In = x.shape
    H = params["w1"].shape[1]
    Out = params["w4"].shape[1]

    # Batch tile: multiple of 8 (sublane alignment), capped at the batch size.
    tb = min(tb, pl.cdiv(B, 8) * 8)
    tb = max(8, pl.cdiv(tb, 8) * 8)
    b_pad = pl.cdiv(B, tb) * tb
    if b_pad != B:
        x = jnp.pad(x, ((0, b_pad - B), (0, 0)))
    grid = (b_pad // tb,)

    def row_spec(shape):                      # batch-tiled, streamed per grid step
        return pl.BlockSpec(shape, lambda i: (i, 0))

    def resident_spec(shape):                 # weights/biases: block never changes
        return pl.BlockSpec(shape, lambda i: (0, 0))

    flops = 2 * b_pad * (In * H + H + H + H * Out) + 6 * b_pad * H + 2 * b_pad * Out
    transcendentals = 2 * b_pad * H
    bytes_accessed = 4 * (b_pad * (In + H + 1 + Out)
                          + In * H + H + H + 1 + 1 + H + H * Out + Out)

    feat, enc, dec = pl.pallas_call(
        autoencoder_kernel,
        grid=grid,
        out_shape=(
            jax.ShapeDtypeStruct((b_pad, H), jnp.float32),     # feature
            jax.ShapeDtypeStruct((b_pad, 1), jnp.float32),     # encoded
            jax.ShapeDtypeStruct((b_pad, Out), jnp.float32),   # decoded
        ),
        in_specs=[
            row_spec((tb, In)),                                   # x (streamed)
            resident_spec((In, H)),                               # w1
            resident_spec((1, H)),                                # b1
            resident_spec((H, 1)),                                # w2
            pl.BlockSpec(memory_space=pltpu.MemorySpace.SMEM),    # b2 (1,1) scalar
            resident_spec((1, H)),                                # w3
            resident_spec((1, H)),                                # b3
            resident_spec((H, Out)),                              # w4
            resident_spec((1, Out)),                              # b4
        ],
        out_specs=(
            row_spec((tb, H)),
            row_spec((tb, 1)),
            row_spec((tb, Out)),
        ),
        compiler_params=pltpu.CompilerParams(
            dimension_semantics=("parallel",),                    # megacore on v7x
        ),
        cost_estimate=pl.CostEstimate(
            flops=flops,
            transcendentals=transcendentals,
            bytes_accessed=bytes_accessed,
        ),
    )(
        x,
        params["w1"], params["b1"],
        params["w2"], params["b2"],
        params["w3"], params["b3"],
        params["w4"], params["b4"],
    )

    if b_pad != B:
        feat, enc, dec = feat[:B], enc[:B], dec[:B]
    return feat, enc, dec


def init_params(key, input_size, hidden_size, output_size):
    """Deterministic init matching nn.Linear shapes (weights stored as (in, out))."""
    ks = jax.random.split(key, 8)

    def linear(kw, kb, fan_in, fan_out):
        bound = 1.0 / jnp.sqrt(jnp.float32(fan_in))
        w = jax.random.uniform(kw, (fan_in, fan_out), jnp.float32, -bound, bound)
        b = jax.random.uniform(kb, (1, fan_out), jnp.float32, -bound, bound)
        return w, b

    w1, b1 = linear(ks[0], ks[1], input_size, hidden_size)   # encoder Linear
    w2, b2 = linear(ks[2], ks[3], hidden_size, 1)            # encoder2
    w3, b3 = linear(ks[4], ks[5], 1, hidden_size)            # decoder Linear(1, H)
    w4, b4 = linear(ks[6], ks[7], hidden_size, output_size)  # decoder Linear(H, Out)
    return {"w1": w1, "b1": b1, "w2": w2, "b2": b2,
            "w3": w3, "b3": b3, "w4": w4, "b4": b4}


def reference_forward(x, p):
    feature = jnp.tanh(x @ p["w1"] + p["b1"])
    encoded = feature @ p["w2"] + p["b2"]
    h = jnp.tanh(encoded @ p["w3"] + p["b3"])
    decoded = h @ p["w4"] + p["b4"]
    return feature, encoded, decoded


if __name__ == "__main__":
    key = jax.random.PRNGKey(0)
    k_x, k_p = jax.random.split(key)

    batch, input_size, hidden_size, output_size = 512, 64, 32, 64
    x = jax.random.normal(k_x, (batch, input_size), jnp.float32)
    params = init_params(k_p, input_size, hidden_size, output_size)

    # tb=128 exercises a multi-step batch grid even at this small demo size
    # (production default tb=1024 amortizes per-step overhead).
    feature, encoded, decoded = autoencoder_forward(x, params, tb=128)
    jax.block_until_ready((feature, encoded, decoded))

    # sanity check against a pure-JAX reference
    f_ref, e_ref, d_ref = reference_forward(x, params)
    assert jnp.allclose(feature, f_ref, atol=1e-5), "feature mismatch"
    assert jnp.allclose(encoded, e_ref, atol=1e-5), "encoded mismatch"
    assert jnp.allclose(decoded, d_ref, atol=1e-5), "decoded mismatch"

    print("KERNEL_OK")
</pallas_src>

<mosaic_0001>
module attributes {stable_mosaic.version = 11 : i64} {
  func.func @autoencoder_kernel(%arg0: i32, %arg1: memref<128x64xf32, #tpu.memory_space<vmem>>, %arg2: memref<64x32xf32, #tpu.memory_space<vmem>>, %arg3: memref<1x32xf32, #tpu.memory_space<vmem>>, %arg4: memref<32x1xf32, #tpu.memory_space<vmem>>, %arg5: memref<1x1xf32, #tpu.memory_space<smem>>, %arg6: memref<1x32xf32, #tpu.memory_space<vmem>>, %arg7: memref<1x32xf32, #tpu.memory_space<vmem>>, %arg8: memref<32x64xf32, #tpu.memory_space<vmem>>, %arg9: memref<1x64xf32, #tpu.memory_space<vmem>>, %arg10: memref<128x32xf32, #tpu.memory_space<vmem>>, %arg11: memref<128x1xf32, #tpu.memory_space<vmem>>, %arg12: memref<128x64xf32, #tpu.memory_space<vmem>>) attributes {dimension_semantics = [#tpu.dimension_semantics<parallel>], iteration_bounds = array<i64: 4>, scalar_prefetch = 0 : i64, scratch_operands = 0 : i64, tpu.core_type = #tpu.core_type<tc>, window_params = [{transform_indices = @transform_0, window_bounds = array<i64: 128, 64>}, {pipeline_mode = #tpu.pipeline_mode<synchronous>, transform_indices = @transform_1, window_bounds = array<i64: 64, 32>}, {pipeline_mode = #tpu.pipeline_mode<synchronous>, transform_indices = @transform_2, window_bounds = array<i64: 1, 32>}, {pipeline_mode = #tpu.pipeline_mode<synchronous>, transform_indices = @transform_3, window_bounds = array<i64: 32, 1>}, {transform_indices = @transform_4, window_bounds = array<i64: 1, 1>}, {pipeline_mode = #tpu.pipeline_mode<synchronous>, transform_indices = @transform_5, window_bounds = array<i64: 1, 32>}, {pipeline_mode = #tpu.pipeline_mode<synchronous>, transform_indices = @transform_6, window_bounds = array<i64: 1, 32>}, {pipeline_mode = #tpu.pipeline_mode<synchronous>, transform_indices = @transform_7, window_bounds = array<i64: 32, 64>}, {pipeline_mode = #tpu.pipeline_mode<synchronous>, transform_indices = @transform_8, window_bounds = array<i64: 1, 64>}, {transform_indices = @transform_9, window_bounds = array<i64: 128, 32>}, {transform_indices = @transform_10, window_bounds = array<i64: 128, 1>}, {transform_indices = @transform_11, window_bounds = array<i64: 128, 64>}]} {
    %c0 = arith.constant 0 : index
    %c0_0 = arith.constant 0 : index
    %0 = vector.load %arg1[%c0, %c0_0] : memref<128x64xf32, #tpu.memory_space<vmem>>, vector<128x64xf32>
    %c0_1 = arith.constant 0 : index
    %c0_2 = arith.constant 0 : index
    %1 = vector.load %arg2[%c0_1, %c0_2] : memref<64x32xf32, #tpu.memory_space<vmem>>, vector<64x32xf32>
    %cst = arith.constant dense<0.000000e+00> : vector<128x32xf32>
    %2 = tpu.matmul %0, %1, %cst {dimension_numbers = #tpu.dot_dimension_numbers<[1], [0], [0], [1], [0, 0, 1, 1], [], []>} : vector<128x64xf32>, vector<64x32xf32>, vector<128x32xf32> -> vector<128x32xf32>
    %c0_3 = arith.constant 0 : index
    %c0_4 = arith.constant 0 : index
    %3 = vector.load %arg3[%c0_3, %c0_4] : memref<1x32xf32, #tpu.memory_space<vmem>>, vector<1x32xf32>
    %4 = vector.broadcast %3 : vector<1x32xf32> to vector<128x32xf32>
    %5 = arith.addf %2, %4 : vector<128x32xf32>
    %6 = math.tanh %5 : vector<128x32xf32>
    %c0_5 = arith.constant 0 : index
    %c0_6 = arith.constant 0 : index
    %7 = vector.load %arg4[%c0_5, %c0_6] : memref<32x1xf32, #tpu.memory_space<vmem>>, vector<32x1xf32>
    %cst_7 = arith.constant dense<0.000000e+00> : vector<128x1xf32>
    %8 = tpu.matmul %6, %7, %cst_7 {dimension_numbers = #tpu.dot_dimension_numbers<[1], [0], [0], [1], [0, 0, 1, 1], [], []>} : vector<128x32xf32>, vector<32x1xf32>, vector<128x1xf32> -> vector<128x1xf32>
    %c0_8 = arith.constant 0 : index
    %c0_9 = arith.constant 0 : index
    %9 = memref.load %arg5[%c0_8, %c0_9] : memref<1x1xf32, #tpu.memory_space<smem>>
    %10 = vector.broadcast %9 : f32 to vector<128x1xf32>
    %11 = arith.addf %8, %10 : vector<128x1xf32>
    %c0_10 = arith.constant 0 : index
    %c0_11 = arith.constant 0 : index
    %12 = vector.load %arg6[%c0_10, %c0_11] : memref<1x32xf32, #tpu.memory_space<vmem>>, vector<1x32xf32>
    %13 = vector.broadcast %11 : vector<128x1xf32> to vector<128x32xf32>
    %14 = vector.broadcast %12 : vector<1x32xf32> to vector<128x32xf32>
    %15 = arith.mulf %13, %14 : vector<128x32xf32>
    %c0_12 = arith.constant 0 : index
    %c0_13 = arith.constant 0 : index
    %16 = vector.load %arg7[%c0_12, %c0_13] : memref<1x32xf32, #tpu.memory_space<vmem>>, vector<1x32xf32>
    %17 = vector.broadcast %16 : vector<1x32xf32> to vector<128x32xf32>
    %18 = arith.addf %15, %17 : vector<128x32xf32>
    %19 = math.tanh %18 : vector<128x32xf32>
    %c0_14 = arith.constant 0 : index
    %c0_15 = arith.constant 0 : index
    %20 = vector.load %arg8[%c0_14, %c0_15] : memref<32x64xf32, #tpu.memory_space<vmem>>, vector<32x64xf32>
    %cst_16 = arith.constant dense<0.000000e+00> : vector<128x64xf32>
    %21 = tpu.matmul %19, %20, %cst_16 {dimension_numbers = #tpu.dot_dimension_numbers<[1], [0], [0], [1], [0, 0, 1, 1], [], []>} : vector<128x32xf32>, vector<32x64xf32>, vector<128x64xf32> -> vector<128x64xf32>
    %c0_17 = arith.constant 0 : index
    %c0_18 = arith.constant 0 : index
    %22 = vector.load %arg9[%c0_17, %c0_18] : memref<1x64xf32, #tpu.memory_space<vmem>>, vector<1x64xf32>
    %23 = vector.broadcast %22 : vector<1x64xf32> to vector<128x64xf32>
    %24 = arith.addf %21, %23 : vector<128x64xf32>
    %c0_19 = arith.constant 0 : index
    %c0_20 = arith.constant 0 : index
    %25 = vector.load %arg10[%c0_19, %c0_20] : memref<128x32xf32, #tpu.memory_space<vmem>>, vector<128x32xf32>
    tpu.vector_store %arg10[%c0_19, %c0_20], %6 {strides = array<i32>} : memref<128x32xf32, #tpu.memory_space<vmem>>, vector<128x32xf32>,
    %c0_21 = arith.constant 0 : index
    %c0_22 = arith.constant 0 : index
    %26 = vector.load %arg11[%c0_21, %c0_22] : memref<128x1xf32, #tpu.memory_space<vmem>>, vector<128x1xf32>
    tpu.vector_store %arg11[%c0_21, %c0_22], %11 {strides = array<i32>} : memref<128x1xf32, #tpu.memory_space<vmem>>, vector<128x1xf32>,
    %c0_23 = arith.constant 0 : index
    %c0_24 = arith.constant 0 : index
    %27 = vector.load %arg12[%c0_23, %c0_24] : memref<128x64xf32, #tpu.memory_space<vmem>>, vector<128x64xf32>
    tpu.vector_store %arg12[%c0_23, %c0_24], %24 {strides = array<i32>} : memref<128x64xf32, #tpu.memory_space<vmem>>, vector<128x64xf32>,
    return
  }
  func.func @transform_0(%arg0: i32) -> (i32, i32) {
    %c0_i32 = arith.constant 0 : i32
    %c0_i32_0 = arith.constant 0 : i32
    return %arg0, %c0_i32 : i32, i32
  }
  func.func @transform_1(%arg0: i32) -> (i32, i32) {
    %c0_i32 = arith.constant 0 : i32
    %c0_i32_0 = arith.constant 0 : i32
    %c0_i32_1 = arith.constant 0 : i32
    return %c0_i32, %c0_i32_0 : i32, i32
  }
  func.func @transform_2(%arg0: i32) -> (i32, i32) {
    %c0_i32 = arith.constant 0 : i32
    %c0_i32_0 = arith.constant 0 : i32
    %c0_i32_1 = arith.constant 0 : i32
    return %c0_i32, %c0_i32_0 : i32, i32
  }
  func.func @transform_3(%arg0: i32) -> (i32, i32) {
    %c0_i32 = arith.constant 0 : i32
    %c0_i32_0 = arith.constant 0 : i32
    %c0_i32_1 = arith.constant 0 : i32
    return %c0_i32, %c0_i32_0 : i32, i32
  }
  func.func @transform_4(%arg0: i32) -> (i32, i32) {
    %c0_i32 = arith.constant 0 : i32
    %c0_i32_0 = arith.constant 0 : i32
    %c0_i32_1 = arith.constant 0 : i32
    return %c0_i32, %c0_i32_0 : i32, i32
  }
  func.func @transform_5(%arg0: i32) -> (i32, i32) {
    %c0_i32 = arith.constant 0 : i32
    %c0_i32_0 = arith.constant 0 : i32
    %c0_i32_1 = arith.constant 0 : i32
    return %c0_i32, %c0_i32_0 : i32, i32
  }
  func.func @transform_6(%arg0: i32) -> (i32, i32) {
    %c0_i32 = arith.constant 0 : i32
    %c0_i32_0 = arith.constant 0 : i32
    %c0_i32_1 = arith.constant 0 : i32
    return %c0_i32, %c0_i32_0 : i32, i32
  }
  func.func @transform_7(%arg0: i32) -> (i32, i32) {
    %c0_i32 = arith.constant 0 : i32
    %c0_i32_0 = arith.constant 0 : i32
    %c0_i32_1 = arith.constant 0 : i32
    return %c0_i32, %c0_i32_0 : i32, i32
  }
  func.func @transform_8(%arg0: i32) -> (i32, i32) {
    %c0_i32 = arith.constant 0 : i32
    %c0_i32_0 = arith.constant 0 : i32
    %c0_i32_1 = arith.constant 0 : i32
    return %c0_i32, %c0_i32_0 : i32, i32
  }
  func.func @transform_9(%arg0: i32) -> (i32, i32) {
    %c0_i32 = arith.constant 0 : i32
    %c0_i32_0 = arith.constant 0 : i32
    return %arg0, %c0_i32 : i32, i32
  }
  func.func @transform_10(%arg0: i32) -> (i32, i32) {
    %c0_i32 = arith.constant 0 : i32
    %c0_i32_0 = arith.constant 0 : i32
    return %arg0, %c0_i32 : i32, i32
  }
  func.func @transform_11(%arg0: i32) -> (i32, i32) {
    %c0_i32 = arith.constant 0 : i32
    %c0_i32_0 = arith.constant 0 : i32
    return %arg0, %c0_i32 : i32, i32
  }
}

</mosaic_0001>

<llo_original>
// kernel: tpu_custom_call.1
$region0: #{tpu_custom_call.1}
  #allocation0 [shape = 'u32[]', space=smem, size = 0x4, offset = 0x4, fixed_abs, tag = 'smem constant byte address 0x4 - core index']
  #allocation1 [shape = 'u32[72,128]{1,0:T(1,128)}', space=vmem, size = 0x9000, scoped, tag = 'internal scratch']
  #allocation2 [shape = 'f32[1,1]{1,0:T(1,128)S(6)}', space=smem, size = 0x200, scoped, tag = 'scoped memory for tpu_custom_call.1']
  %s0 = inlined_call_operand.vmem [shape: f32[512,64], index: 0, kind: input, shape index: {}]
  %s1 = inlined_call_operand.vmem [shape: f32[64,32], index: 1, kind: input, shape index: {}]
  %s2 = inlined_call_operand.vmem [shape: f32[1,32], index: 2, kind: input, shape index: {}]
  %s3 = inlined_call_operand.vmem [shape: f32[32,1], index: 3, kind: input, shape index: {}]
  %s4 = inlined_call_operand.<no memory space> [shape: f32[1,1], index: 4, kind: input, shape index: {}]
  %s5 = inlined_call_operand.vmem [shape: f32[1,32], index: 5, kind: input, shape index: {}]
  %s6 = inlined_call_operand.vmem [shape: f32[1,32], index: 6, kind: input, shape index: {}]
  %s7 = inlined_call_operand.vmem [shape: f32[32,64], index: 7, kind: input, shape index: {}]
  %s8 = inlined_call_operand.vmem [shape: f32[1,64], index: 8, kind: input, shape index: {}]
  %s9 = inlined_call_operand.vmem [shape: f32[512,32], index: 9, kind: output, shape index: {0}]
  %s10 = inlined_call_operand.vmem [shape: f32[512,1], index: 10, kind: output, shape index: {1}]
  %s11 = inlined_call_operand.vmem [shape: f32[512,64], index: 11, kind: output, shape index: {2}]
  %12 = xla_tuple %s9, %s10, %s11
  %s13 = sld [smem:[#allocation0]]
  $region85: #{tpu_custom_call.1} parent=0
    _
  %s15 = ssub.s32 1, %s13
  %s16 = scalar_select 0, %s15, %s13
  %17 = sst [smem:[#allocation2]] %s4
  loop: start=0, step=1, limit=6
  $region2: #{tpu_custom_call.1} parent=0 // loop_pre_header
    _
  $region3: #{tpu_custom_call.1} parent=0 // loop_header
    %s19 = sphi 0, %s23
    %p20 = scmp.ge.s32.totalorder %s19, 6
    %s29 = sphi 0, %s31
    %s32 = sphi 0, %s29
    %s33 = sphi 0, %s32
    %s49 = sphi 0, %s33
    %s53 = sphi 0, %s53
    %s55 = sphi 0, %s53
    %s56 = sphi 0, %s55
    %s70 = sphi 0, %s56
    %s74 = sphi 0, %s74
    %s76 = sphi 0, %s74
    %s77 = sphi 0, %s76
    %s91 = sphi 0, %s77
    %s95 = sphi 0, %s95
    %s97 = sphi 0, %s95
    %s98 = sphi 0, %s97
    %s112 = sphi 0, %s98
    %s116 = sphi 0, %s116
    %s118 = sphi 0, %s116
    %s119 = sphi 0, %s118
    %s133 = sphi 0, %s119
    %s137 = sphi 0, %s137
    %s139 = sphi 0, %s137
    %s140 = sphi 0, %s139
    %s154 = sphi 0, %s140
    %s158 = sphi 0, %s158
    %s160 = sphi 0, %s158
    %s161 = sphi 0, %s160
    %s175 = sphi 0, %s161
    %s179 = sphi 0, %s179
    %s181 = sphi 0, %s179
    %s182 = sphi 0, %s181
    %s196 = sphi 0, %s182
    %s200 = sphi 0, %s200
    %s202 = sphi 0, %s200
    %s203 = sphi 0, %s202
    %s217 = sphi 0, %s203
    %s223 = sphi 0, %s225
    %s226 = sphi 0, %s223
    %s227 = sphi 0, %s226
    %s243 = sphi 0, %s227
    %s249 = sphi 0, %s251
    %s252 = sphi 0, %s249
    %s253 = sphi 0, %s252
    %s269 = sphi 0, %s253
    %s275 = sphi 0, %s277
    %s278 = sphi 0, %s275
    %s279 = sphi 0, %s278
    %s295 = sphi 0, %s279
  $region4: #{tpu_custom_call.1} parent=0 // loop_header_branch
    %22 = sbr.rel (%p20) target = $region8
  $region5: #{tpu_custom_call.1} parent=0 // loop_body
    %s24 = ssub.s32 %s19, 1
    %s25 = ssub.s32 %s19, 2
    %s26 = sadd.s32 %s19, 1
    %s27 = ssub.s32 %s19, %s26
    %p28 = scmp.eq.s32.totalorder %s27, 0
    %s30 = sadd.s32 %s29, 1
    %s31 = scalar_select %p28, %s29, %s30
    %p34 = pneg %p28
    %p35 = scmp.eq.s32.totalorder %s19, 3
    %p36 = por %p34, %p35
    %p37 = scmp.ne.s32.totalorder %s29, %s32
    %p38 = scmp.eq.s32.totalorder %s19, 0
    %p39 = por %p37, %p38
    %p40 = scmp.ne.s32.totalorder %s29, %s32
    %p41 = scmp.eq.s32.totalorder %s24, 3
    %p42 = por %p40, %p41
    %p43 = scmp.ne.s32.totalorder %s32, %s33
    %p44 = scmp.eq.s32.totalorder %s24, 0
    %p45 = por %p43, %p44
    %p46 = scmp.ne.s32.totalorder %s32, %s33
    %p47 = scmp.eq.s32.totalorder %s25, 3
    %p48 = por %p46, %p47
    %p50 = scmp.ne.s32.totalorder %s33, %s49
    %p51 = scmp.eq.s32.totalorder %s25, 0
    %p52 = por %p50, %p51
    %s54 = sadd.s32 %s53, 1
    %p57 = scmp.eq.s32.totalorder %s19, 3
    %p58 = scmp.ne.s32.totalorder %s53, %s55
    %p59 = scmp.eq.s32.totalorder %s19, 0
    %p60 = por %p58, %p59
    %p61 = scmp.ne.s32.totalorder %s53, %s55
    %p62 = scmp.eq.s32.totalorder %s24, 3
    %p63 = por %p61, %p62
    %p64 = scmp.ne.s32.totalorder %s55, %s56
    %p65 = scmp.eq.s32.totalorder %s24, 0
    %p66 = por %p64, %p65
    %p67 = scmp.ne.s32.totalorder %s55, %s56
    %p68 = scmp.eq.s32.totalorder %s25, 3
    %p69 = por %p67, %p68
    %p71 = scmp.ne.s32.totalorder %s56, %s70
    %p72 = scmp.eq.s32.totalorder %s25, 0
    %p73 = por %p71, %p72
    %s75 = sadd.s32 %s74, 1
    %p78 = scmp.eq.s32.totalorder %s19, 3
    %p79 = scmp.ne.s32.totalorder %s74, %s76
    %p80 = scmp.eq.s32.totalorder %s19, 0
    %p81 = por %p79, %p80
    %p82 = scmp.ne.s32.totalorder %s74, %s76
    %p83 = scmp.eq.s32.totalorder %s24, 3
    %p84 = por %p82, %p83
    %p85 = scmp.ne.s32.totalorder %s76, %s77
    %p86 = scmp.eq.s32.totalorder %s24, 0
    %p87 = por %p85, %p86
    %p88 = scmp.ne.s32.totalorder %s76, %s77
    %p89 = scmp.eq.s32.totalorder %s25, 3
    %p90 = por %p88, %p89
    %p92 = scmp.ne.s32.totalorder %s77, %s91
    %p93 = scmp.eq.s32.totalorder %s25, 0
    %p94 = por %p92, %p93
    %s96 = sadd.s32 %s95, 1
    %p99 = scmp.eq.s32.totalorder %s19, 3
    %p100 = scmp.ne.s32.totalorder %s95, %s97
    %p101 = scmp.eq.s32.totalorder %s19, 0
    %p102 = por %p100, %p101
    %p103 = scmp.ne.s32.totalorder %s95, %s97
    %p104 = scmp.eq.s32.totalorder %s24, 3
    %p105 = por %p103, %p104
    %p106 = scmp.ne.s32.totalorder %s97, %s98
    %p107 = scmp.eq.s32.totalorder %s24, 0
    %p108 = por %p106, %p107
    %p109 = scmp.ne.s32.totalorder %s97, %s98
    %p110 = scmp.eq.s32.totalorder %s25, 3
    %p111 = por %p109, %p110
    %p113 = scmp.ne.s32.totalorder %s98, %s112
    %p114 = scmp.eq.s32.totalorder %s25, 0
    %p115 = por %p113, %p114
    %s117 = sadd.s32 %s116, 1
    %p120 = scmp.eq.s32.totalorder %s19, 3
    %p121 = scmp.ne.s32.totalorder %s116, %s118
    %p122 = scmp.eq.s32.totalorder %s19, 0
    %p123 = por %p121, %p122
    %p124 = scmp.ne.s32.totalorder %s116, %s118
    %p125 = scmp.eq.s32.totalorder %s24, 3
    %p126 = por %p124, %p125
    %p127 = scmp.ne.s32.totalorder %s118, %s119
    %p128 = scmp.eq.s32.totalorder %s24, 0
    %p129 = por %p127, %p128
    %p130 = scmp.ne.s32.totalorder %s118, %s119
    %p131 = scmp.eq.s32.totalorder %s25, 3
    %p132 = por %p130, %p131
    %p134 = scmp.ne.s32.totalorder %s119, %s133
    %p135 = scmp.eq.s32.totalorder %s25, 0
    %p136 = por %p134, %p135
    %s138 = sadd.s32 %s137, 1
    %p141 = scmp.eq.s32.totalorder %s19, 3
    %p142 = scmp.ne.s32.totalorder %s137, %s139
    %p143 = scmp.eq.s32.totalorder %s19, 0
    %p144 = por %p142, %p143
    %p145 = scmp.ne.s32.totalorder %s137, %s139
    %p146 = scmp.eq.s32.totalorder %s24, 3
    %p147 = por %p145, %p146
    %p148 = scmp.ne.s32.totalorder %s139, %s140
    %p149 = scmp.eq.s32.totalorder %s24, 0
    %p150 = por %p148, %p149
    %p151 = scmp.ne.s32.totalorder %s139, %s140
    %p152 = scmp.eq.s32.totalorder %s25, 3
    %p153 = por %p151, %p152
    %p155 = scmp.ne.s32.totalorder %s140, %s154
    %p156 = scmp.eq.s32.totalorder %s25, 0
    %p157 = por %p155, %p156
    %s159 = sadd.s32 %s158, 1
    %p162 = scmp.eq.s32.totalorder %s19, 3
    %p163 = scmp.ne.s32.totalorder %s158, %s160
    %p164 = scmp.eq.s32.totalorder %s19, 0
    %p165 = por %p163, %p164
    %p166 = scmp.ne.s32.totalorder %s158, %s160
    %p167 = scmp.eq.s32.totalorder %s24, 3
    %p168 = por %p166, %p167
    %p169 = scmp.ne.s32.totalorder %s160, %s161
    %p170 = scmp.eq.s32.totalorder %s24, 0
    %p171 = por %p169, %p170
    %p172 = scmp.ne.s32.totalorder %s160, %s161
    %p173 = scmp.eq.s32.totalorder %s25, 3
    %p174 = por %p172, %p173
    %p176 = scmp.ne.s32.totalorder %s161, %s175
    %p177 = scmp.eq.s32.totalorder %s25, 0
    %p178 = por %p176, %p177
    %s180 = sadd.s32 %s179, 1
    %p183 = scmp.eq.s32.totalorder %s19, 3
    %p184 = scmp.ne.s32.totalorder %s179, %s181
    %p185 = scmp.eq.s32.totalorder %s19, 0
    %p186 = por %p184, %p185
    %p187 = scmp.ne.s32.totalorder %s179, %s181
    %p188 = scmp.eq.s32.totalorder %s24, 3
    %p189 = por %p187, %p188
    %p190 = scmp.ne.s32.totalorder %s181, %s182
    %p191 = scmp.eq.s32.totalorder %s24, 0
    %p192 = por %p190, %p191
    %p193 = scmp.ne.s32.totalorder %s181, %s182
    %p194 = scmp.eq.s32.totalorder %s25, 3
    %p195 = por %p193, %p194
    %p197 = scmp.ne.s32.totalorder %s182, %s196
    %p198 = scmp.eq.s32.totalorder %s25, 0
    %p199 = por %p197, %p198
    %s201 = sadd.s32 %s200, 1
    %p204 = scmp.eq.s32.totalorder %s19, 3
    %p205 = scmp.ne.s32.totalorder %s200, %s202
    %p206 = scmp.eq.s32.totalorder %s19, 0
    %p207 = por %p205, %p206
    %p208 = scmp.ne.s32.totalorder %s200, %s202
    %p209 = scmp.eq.s32.totalorder %s24, 3
    %p210 = por %p208, %p209
    %p211 = scmp.ne.s32.totalorder %s202, %s203
    %p212 = scmp.eq.s32.totalorder %s24, 0
    %p213 = por %p211, %p212
    %p214 = scmp.ne.s32.totalorder %s202, %s203
    %p215 = scmp.eq.s32.totalorder %s25, 3
    %p216 = por %p214, %p215
    %p218 = scmp.ne.s32.totalorder %s203, %s217
    %p219 = scmp.eq.s32.totalorder %s25, 0
    %p220 = por %p218, %p219
    %s221 = ssub.s32 %s19, %s26
    %p222 = scmp.eq.s32.totalorder %s221, 0
    %s224 = sadd.s32 %s223, 1
    %s225 = scalar_select %p222, %s223, %s224
    %p228 = pneg %p222
    %p229 = scmp.eq.s32.totalorder %s19, 3
    %p230 = por %p228, %p229
    %p231 = scmp.ne.s32.totalorder %s223, %s226
    %p232 = scmp.eq.s32.totalorder %s19, 0
    %p233 = por %p231, %p232
    %p234 = scmp.ne.s32.totalorder %s223, %s226
    %p235 = scmp.eq.s32.totalorder %s24, 3
    %p236 = por %p234, %p235
    %p237 = scmp.ne.s32.totalorder %s226, %s227
    %p238 = scmp.eq.s32.totalorder %s24, 0
    %p239 = por %p237, %p238
    %p240 = scmp.ne.s32.totalorder %s226, %s227
    %p241 = scmp.eq.s32.totalorder %s25, 3
    %p242 = por %p240, %p241
    %p244 = scmp.ne.s32.totalorder %s227, %s243
    %p245 = scmp.eq.s32.totalorder %s25, 0
    %p246 = por %p244, %p245
    %s247 = ssub.s32 %s19, %s26
    %p248 = scmp.eq.s32.totalorder %s247, 0
    %s250 = sadd.s32 %s249, 1
    %s251 = scalar_select %p248, %s249, %s250
    %p254 = pneg %p248
    %p255 = scmp.eq.s32.totalorder %s19, 3
    %p256 = por %p254, %p255
    %p257 = scmp.ne.s32.totalorder %s249, %s252
    %p258 = scmp.eq.s32.totalorder %s19, 0
    %p259 = por %p257, %p258
    %p260 = scmp.ne.s32.totalorder %s249, %s252
    %p261 = scmp.eq.s32.totalorder %s24, 3
    %p262 = por %p260, %p261
    %p263 = scmp.ne.s32.totalorder %s252, %s253
    %p264 = scmp.eq.s32.totalorder %s24, 0
    %p265 = por %p263, %p264
    %p266 = scmp.ne.s32.totalorder %s252, %s253
    %p267 = scmp.eq.s32.totalorder %s25, 3
    %p268 = por %p266, %p267
    %p270 = scmp.ne.s32.totalorder %s253, %s269
    %p271 = scmp.eq.s32.totalorder %s25, 0
    %p272 = por %p270, %p271
    %s273 = ssub.s32 %s19, %s26
    %p274 = scmp.eq.s32.totalorder %s273, 0
    %s276 = sadd.s32 %s275, 1
    %s277 = scalar_select %p274, %s275, %s276
    %p280 = pneg %p274
    %p281 = scmp.eq.s32.totalorder %s19, 3
    %p282 = por %p280, %p281
    %p283 = scmp.ne.s32.totalorder %s275, %s278
    %p284 = scmp.eq.s32.totalorder %s19, 0
    %p285 = por %p283, %p284
    %p286 = scmp.ne.s32.totalorder %s275, %s278
    %p287 = scmp.eq.s32.totalorder %s24, 3
    %p288 = por %p286, %p287
    %p289 = scmp.ne.s32.totalorder %s278, %s279
    %p290 = scmp.eq.s32.totalorder %s24, 0
    %p291 = por %p289, %p290
    %p292 = scmp.ne.s32.totalorder %s278, %s279
    %p293 = scmp.eq.s32.totalorder %s25, 3
    %p294 = por %p292, %p293
    %p296 = scmp.ne.s32.totalorder %s279, %s295
    %p297 = scmp.eq.s32.totalorder %s25, 0
    %p298 = por %p296, %p297
    %p299 = scmp.le.s32.totalorder 1, %s19
    %p300 = scmp.lt.s32.totalorder %s19, 5
    %p301 = pnand %p299, %p300
    %p302 = pneg %p301
    // Predicated region
    $region9: #{tpu_custom_call.1} parent=5 // pred_check
      _
    $region10: #{tpu_custom_call.1} parent=5 // pred_check_branch
      %304 = sbr.rel (%p301) target = $region12
    $region11: #{tpu_custom_call.1} parent=5 // pred_region
      %s305 = ssub.s32 %s19, 1
      // Predicated region
      $region13: #{tpu_custom_call.1} parent=11 // pred_check
        %p306 = pneg %p66
      $region14: #{tpu_custom_call.1} parent=11 // pred_check_branch
        %308 = sbr.rel (%p306) target = $region16
      $region15: #{tpu_custom_call.1} parent=11 // pred_region
        _
      $region16: #{tpu_custom_call.1} parent=11 // pred_fallthru
        _
      // Predicated region
      $region17: #{tpu_custom_call.1} parent=11 // pred_check
        %p309 = pneg %p87
      $region18: #{tpu_custom_call.1} parent=11 // pred_check_branch
        %311 = sbr.rel (%p309) target = $region20
      $region19: #{tpu_custom_call.1} parent=11 // pred_region
        _
      $region20: #{tpu_custom_call.1} parent=11 // pred_fallthru
        _
      // Predicated region
      $region21: #{tpu_custom_call.1} parent=11 // pred_check
        %p312 = pneg %p108
      $region22: #{tpu_custom_call.1} parent=11 // pred_check_branch
        %314 = sbr.rel (%p312) target = $region24
      $region23: #{tpu_custom_call.1} parent=11 // pred_region
        _
      $region24: #{tpu_custom_call.1} parent=11 // pred_fallthru
        _
      // Predicated region
      $region25: #{tpu_custom_call.1} parent=11 // pred_check
        %p315 = pneg %p129
      $region26: #{tpu_custom_call.1} parent=11 // pred_check_branch
        %317 = sbr.rel (%p315) target = $region28
      $region27: #{tpu_custom_call.1} parent=11 // pred_region
        _
      $region28: #{tpu_custom_call.1} parent=11 // pred_fallthru
        _
      // Predicated region
      $region29: #{tpu_custom_call.1} parent=11 // pred_check
        %p318 = pneg %p150
      $region30: #{tpu_custom_call.1} parent=11 // pred_check_branch
        %320 = sbr.rel (%p318) target = $region32
      $region31: #{tpu_custom_call.1} parent=11 // pred_region
        _
      $region32: #{tpu_custom_call.1} parent=11 // pred_fallthru
        _
      // Predicated region
      $region33: #{tpu_custom_call.1} parent=11 // pred_check
        %p321 = pneg %p171
      $region34: #{tpu_custom_call.1} parent=11 // pred_check_branch
        %323 = sbr.rel (%p321) target = $region36
      $region35: #{tpu_custom_call.1} parent=11 // pred_region
        _
      $region36: #{tpu_custom_call.1} parent=11 // pred_fallthru
        _
      // Predicated region
      $region37: #{tpu_custom_call.1} parent=11 // pred_check
        %p324 = pneg %p192
      $region38: #{tpu_custom_call.1} parent=11 // pred_check_branch
        %326 = sbr.rel (%p324) target = $region40
      $region39: #{tpu_custom_call.1} parent=11 // pred_region
        _
      $region40: #{tpu_custom_call.1} parent=11 // pred_fallthru
        _
      // Predicated region
      $region41: #{tpu_custom_call.1} parent=11 // pred_check
        %p327 = pneg %p213
      $region42: #{tpu_custom_call.1} parent=11 // pred_check_branch
        %329 = sbr.rel (%p327) target = $region44
      $region43: #{tpu_custom_call.1} parent=11 // pred_region
        _
      $region44: #{tpu_custom_call.1} parent=11 // pred_fallthru
        _
    $region12: #{tpu_custom_call.1} parent=5 // pred_fallthru
      _
    %p330 = scmp.lt.s32.totalorder %s19, 4
    // Predicated region
    $region45: #{tpu_custom_call.1} parent=5 // pred_check
      %p331 = pneg %p330
    $region46: #{tpu_custom_call.1} parent=5 // pred_check_branch
      %333 = sbr.rel (%p331) target = $region48
    $region47: #{tpu_custom_call.1} parent=5 // pred_region
      // Predicated region
      $region49: #{tpu_custom_call.1} parent=47 // pred_check
        %p334 = pneg %p39
      $region50: #{tpu_custom_call.1} parent=47 // pred_check_branch
        %336 = sbr.rel (%p334) target = $region52
      $region51: #{tpu_custom_call.1} parent=47 // pred_region
        %s337 = smul.u32 16, %s19
        %p338 = scmp.lt.s32.totalorder %s337, 63
        %s339 = scalar_select %p338, %s337, 63
        %s340 = smul.addr %s339, 8
        %s341 = scalar_lea.vmem %s0, %s340
        %s342 = smul.u32 16, %s19
      $region52: #{tpu_custom_call.1} parent=47 // pred_fallthru
        _
    $region48: #{tpu_custom_call.1} parent=5 // pred_fallthru
      _
    %p343 = scmp.le.s32.totalorder 1, %s19
    %p344 = scmp.lt.s32.totalorder %s19, 5
    %p345 = pnand %p343, %p344
    %p346 = pneg %p345
    // Predicated region
    $region53: #{tpu_custom_call.1} parent=5 // pred_check
      _
    $region54: #{tpu_custom_call.1} parent=5 // pred_check_branch
      %348 = sbr.rel (%p345) target = $region56
    $region55: #{tpu_custom_call.1} parent=5 // pred_region
      %s349 = ssub.s32 %s19, 1
      %s350 = smul.u32 16, %s24
      %p351 = scmp.lt.s32.totalorder %s350, 63
      %s352 = scalar_select %p351, %s350, 63
      %s353 = smul.addr %s352, 8
      %s354 = scalar_lea.vmem %s0, %s353
      %p355 = pneg %p45
      %p356 = pneg %p42
      %p357 = pneg %p66
      %p358 = pneg %p63
      %p359 = pneg %p87
      %p360 = pneg %p84
      %p361 = pneg %p108
      %p362 = pneg %p105
      %p363 = pneg %p129
      %p364 = pneg %p126
      %p365 = pneg %p150
      %p366 = pneg %p147
      %p367 = pneg %p171
      %p368 = pneg %p168
      %p369 = pneg %p192
      %p370 = pneg %p189
      %p371 = pneg %p213
      %p372 = pneg %p210
      %p373 = pneg %p239
      %p374 = pneg %p236
      %s375 = smul.u32 16, %s24
      %p376 = scmp.lt.s32.totalorder %s375, 63
      %s377 = scalar_select %p376, %s375, 63
      %s378 = smul.addr %s377, 8
      %s379 = scalar_lea.vmem %s9, %s378
      %p380 = pneg %p265
      %p381 = pneg %p262
      %s382 = smul.u32 16, %s24
      %p383 = scmp.lt.s32.totalorder %s382, 63
      %s384 = scalar_select %p383, %s382, 63
      %s385 = smul.addr %s384, 8
      %s386 = scalar_lea.vmem %s10, %s385
      %p387 = pneg %p291
      %p388 = pneg %p288
      %s389 = smul.u32 16, %s24
      %p390 = scmp.lt.s32.totalorder %s389, 63
      %s391 = scalar_select %p390, %s389, 63
      %s392 = smul.addr %s391, 8
      %s393 = scalar_lea.vmem %s11, %s392
      %s394 = smul.u32 16, %s24
      %p395 = scmp.lt.s32.totalorder %s394, 63
      %s396 = scalar_select %p395, %s394, 63
      %s397 = smul.addr %s396, 8
      %s398 = scalar_lea.vmem %s0, %s397
      %s399 = smul.u32 16, %s24
      %s400 = smul.u32 16, %s24
      %p401 = scmp.lt.s32.totalorder %s400, 63
      %s402 = scalar_select %p401, %s400, 63
      %s403 = smul.addr %s402, 8
      %s404 = scalar_lea.vmem %s9, %s403
      %s405 = smul.u32 16, %s24
      %s406 = smul.u32 16, %s24
      %p407 = scmp.lt.s32.totalorder %s406, 63
      %s408 = scalar_select %p407, %s406, 63
      %s409 = smul.addr %s408, 8
      %s410 = scalar_lea.vmem %s10, %s409
      %s411 = smul.u32 16, %s24
      %s412 = smul.u32 16, %s24
      %p413 = scmp.lt.s32.totalorder %s412, 63
      %s414 = scalar_select %p413, %s412, 63
      %s415 = smul.addr %s414, 8
      %s416 = scalar_lea.vmem %s11, %s415
      %s417 = smul.u32 16, %s24
      %v418 = vld [vmem:[%s398] sm:$0xff]
      %v419 = vld [vmem:[%s398 + $0x8] sm:$0xff]
      %v420 = vld [vmem:[%s398 + $0x10] sm:$0xff]
      %v421 = vld [vmem:[%s398 + $0x18] sm:$0xff]
      %v422 = vld [vmem:[%s398 + $0x20] sm:$0xff]
      %v423 = vld [vmem:[%s398 + $0x28] sm:$0xff]
      %v424 = vld [vmem:[%s398 + $0x30] sm:$0xff]
      %v425 = vld [vmem:[%s398 + $0x38] sm:$0xff]
      %v426 = vld [vmem:[%s398 + $0x40] sm:$0xff]
      %v427 = vld [vmem:[%s398 + $0x48] sm:$0xff]
      %v428 = vld [vmem:[%s398 + $0x50] sm:$0xff]
      %v429 = vld [vmem:[%s398 + $0x58] sm:$0xff]
      %v430 = vld [vmem:[%s398 + $0x60] sm:$0xff]
      %v431 = vld [vmem:[%s398 + $0x68] sm:$0xff]
      %v432 = vld [vmem:[%s398 + $0x70] sm:$0xff]
      %v433 = vld [vmem:[%s398 + $0x78] sm:$0xff]
      %v434 = vld [vmem:[%s1] sm:$0xff]
      %v435 = vld [vmem:[%s1 + $0x8] sm:$0xff]
      %v436 = vld [vmem:[%s1 + $0x10] sm:$0xff]
      %v437 = vld [vmem:[%s1 + $0x18] sm:$0xff]
      %v438 = vld [vmem:[%s1 + $0x20] sm:$0xff]
      %v439 = vld [vmem:[%s1 + $0x28] sm:$0xff]
      %v440 = vld [vmem:[%s1 + $0x30] sm:$0xff]
      %v441 = vld [vmem:[%s1 + $0x38] sm:$0xff]
      %v442 = vld [vmem:[%s2] sm:$0x1]
      %v444 = vperm.slane %v442, 0
      %vm446 = vcmask 523264
      %v448 = vsel %vm446, %v418, 0
      %v451 = vsel %vm446, %v419, 0
      %v454 = vsel %vm446, %v420, 0
      %v457 = vsel %vm446, %v421, 0
      %v460 = vsel %vm446, %v422, 0
      %v463 = vsel %vm446, %v423, 0
      %v466 = vsel %vm446, %v424, 0
      %v469 = vsel %vm446, %v425, 0
      %v472 = vsel %vm446, %v426, 0
      %v475 = vsel %vm446, %v427, 0
      %v478 = vsel %vm446, %v428, 0
      %v481 = vsel %vm446, %v429, 0
      %v484 = vsel %vm446, %v430, 0
      %v487 = vsel %vm446, %v431, 0
      %v490 = vsel %vm446, %v432, 0
      %v493 = vsel %vm446, %v433, 0
      %495 = vmatpush.msra.mxu0 0.0
      %496 = vmatpush.msra.mxu0 0.0
      %497 = vmatpush.msra.mxu0 0.0
      %498 = vmatpush.msra.mxu0 0.0
      %499 = vmatpush.msra.mxu0 0.0
      %500 = vmatpush.msra.mxu0 0.0
      %501 = vmatpush.msra.mxu0 0.0
      %502 = vmatpush.msra.mxu0 0.0
      %503 = vmatpush.msra.mxu0 %v441
      %504 = vmatpush.msra.mxu0 %v440
      %505 = vmatpush.msra.mxu0 %v439
      %506 = vmatpush.msra.mxu0 %v438
      %507 = vmatpush.msra.mxu0 %v437
      %508 = vmatpush.msra.mxu0 %v436
      %509 = vmatpush.msra.mxu0 %v435
      %510 = vmatpush.msra.mxu0 %v434
      %511 = vmatmul.f32.gmra.mxu0 %v448
      %v512 = vpop.f32.mrf.mxu0
      %v513 = vadd.f32 %v444, %v512
      %514 = vmatmul.f32.gmra.mxu0 %v451
      %v515 = vpop.f32.mrf.mxu0
      %v516 = vadd.f32 %v444, %v515
      %517 = vmatmul.f32.gmra.mxu0 %v454
      %v518 = vpop.f32.mrf.mxu0
      %v519 = vadd.f32 %v444, %v518
      %520 = vmatmul.f32.gmra.mxu0 %v457
      %v521 = vpop.f32.mrf.mxu0
      %v522 = vadd.f32 %v444, %v521
      %523 = vmatmul.f32.gmra.mxu0 %v460
      %v524 = vpop.f32.mrf.mxu0
      %v525 = vadd.f32 %v444, %v524
      %526 = vmatmul.f32.gmra.mxu0 %v463
      %v527 = vpop.f32.mrf.mxu0
      %v528 = vadd.f32 %v444, %v527
      %529 = vmatmul.f32.gmra.mxu0 %v466
      %v530 = vpop.f32.mrf.mxu0
      %v531 = vadd.f32 %v444, %v530
      %532 = vmatmul.f32.gmra.mxu0 %v469
      %v533 = vpop.f32.mrf.mxu0
      %v534 = vadd.f32 %v444, %v533
      %535 = vmatmul.f32.gmra.mxu0 %v472
      %v536 = vpop.f32.mrf.mxu0
      %v537 = vadd.f32 %v444, %v536
      %538 = vmatmul.f32.gmra.mxu0 %v475
      %v539 = vpop.f32.mrf.mxu0
      %v540 = vadd.f32 %v444, %v539
      %541 = vmatmul.f32.gmra.mxu0 %v478
      %v542 = vpop.f32.mrf.mxu0
      %v543 = vadd.f32 %v444, %v542
      %544 = vmatmul.f32.gmra.mxu0 %v481
      %v545 = vpop.f32.mrf.mxu0
      %v546 = vadd.f32 %v444, %v545
      %547 = vmatmul.f32.gmra.mxu0 %v484
      %v548 = vpop.f32.mrf.mxu0
      %v549 = vadd.f32 %v444, %v548
      %550 = vmatmul.f32.gmra.mxu0 %v487
      %v551 = vpop.f32.mrf.mxu0
      %v552 = vadd.f32 %v444, %v551
      %553 = vmatmul.f32.gmra.mxu0 %v490
      %v554 = vpop.f32.mrf.mxu0
      %v555 = vadd.f32 %v444, %v554
      %556 = vmatmul.f32.gmra.mxu0 %v493
      %v557 = vpop.f32.mrf.mxu0
      %v558 = vadd.f32 %v444, %v557
      %559 = vdwg.mxu0
      %v560 = vtanh.pop %v513
      %v561 = vtanh.pop %v516
      %v562 = vtanh.pop %v519
      %v563 = vtanh.pop %v522
      %v564 = vtanh.pop %v525
      %v565 = vtanh.pop %v528
      %v566 = vtanh.pop %v531
      %v567 = vtanh.pop %v534
      %v568 = vtanh.pop %v537
      %v569 = vtanh.pop %v540
      %v570 = vtanh.pop %v543
      %v571 = vtanh.pop %v546
      %v572 = vtanh.pop %v549
      %v573 = vtanh.pop %v552
      %v574 = vtanh.pop %v555
      %v575 = vtanh.pop %v558
      %v576 = vld [vmem:[%s3] sm:$0xff]
      %v577 = vld [vmem:[%s3 + $0x8] sm:$0xff]
      %v578 = vld [vmem:[%s3 + $0x10] sm:$0xff]
      %v579 = vld [vmem:[%s3 + $0x18] sm:$0xff]
      %s580 = sld [smem:[#allocation2]]
      %v581 = vstv %s580
      %vm582 = vcmask 261120
      %v584 = vsel %vm582, %v560, 0
      %v587 = vsel %vm582, %v561, 0
      %v590 = vsel %vm582, %v562, 0
      %v593 = vsel %vm582, %v563, 0
      %v596 = vsel %vm582, %v564, 0
      %v599 = vsel %vm582, %v565, 0
      %v602 = vsel %vm582, %v566, 0
      %v605 = vsel %vm582, %v567, 0
      %v608 = vsel %vm582, %v568, 0
      %v611 = vsel %vm582, %v569, 0
      %v614 = vsel %vm582, %v570, 0
      %v617 = vsel %vm582, %v571, 0
      %v620 = vsel %vm582, %v572, 0
      %v623 = vsel %vm582, %v573, 0
      %v626 = vsel %vm582, %v574, 0
      %v629 = vsel %vm582, %v575, 0
      %631 = vmatpush.msra.mxu0 0.0
      %632 = vmatpush.msra.mxu0 0.0
      %633 = vmatpush.msra.mxu0 0.0
      %634 = vmatpush.msra.mxu0 0.0
      %635 = vmatpush.msra.mxu0 0.0
      %636 = vmatpush.msra.mxu0 0.0
      %637 = vmatpush.msra.mxu0 0.0
      %638 = vmatpush.msra.mxu0 0.0
      %639 = vmatpush.msra.mxu0 0.0
      %640 = vmatpush.msra.mxu0 0.0
      %641 = vmatpush.msra.mxu0 0.0
      %642 = vmatpush.msra.mxu0 0.0
      %643 = vmatpush.msra.mxu0 %v579
      %644 = vmatpush.msra.mxu0 %v578
      %645 = vmatpush.msra.mxu0 %v577
      %646 = vmatpush.msra.mxu0 %v576
      %647 = vmatmul.f32.gmra.mxu0 %v584
      %v648 = vpop.f32.mrf.mxu0
      %v649 = vadd.f32 %v581, %v648
      %650 = vmatmul.f32.gmra.mxu0 %v587
      %v651 = vpop.f32.mrf.mxu0
      %v652 = vadd.f32 %v581, %v651
      %653 = vmatmul.f32.gmra.mxu0 %v590
      %v654 = vpop.f32.mrf.mxu0
      %v655 = vadd.f32 %v581, %v654
      %656 = vmatmul.f32.gmra.mxu0 %v593
      %v657 = vpop.f32.mrf.mxu0
      %v658 = vadd.f32 %v581, %v657
      %659 = vmatmul.f32.gmra.mxu0 %v596
      %v660 = vpop.f32.mrf.mxu0
      %v661 = vadd.f32 %v581, %v660
      %662 = vmatmul.f32.gmra.mxu0 %v599
      %v663 = vpop.f32.mrf.mxu0
      %v664 = vadd.f32 %v581, %v663
      %665 = vmatmul.f32.gmra.mxu0 %v602
      %v666 = vpop.f32.mrf.mxu0
      %v667 = vadd.f32 %v581, %v666
      %668 = vmatmul.f32.gmra.mxu0 %v605
      %v669 = vpop.f32.mrf.mxu0
      %v670 = vadd.f32 %v581, %v669
      %671 = vmatmul.f32.gmra.mxu0 %v608
      %v672 = vpop.f32.mrf.mxu0
      %v673 = vadd.f32 %v581, %v672
      %674 = vmatmul.f32.gmra.mxu0 %v611
      %v675 = vpop.f32.mrf.mxu0
      %v676 = vadd.f32 %v581, %v675
      %677 = vmatmul.f32.gmra.mxu0 %v614
      %v678 = vpop.f32.mrf.mxu0
      %v679 = vadd.f32 %v581, %v678
      %680 = vmatmul.f32.gmra.mxu0 %v617
      %v681 = vpop.f32.mrf.mxu0
      %v682 = vadd.f32 %v581, %v681
      %683 = vmatmul.f32.gmra.mxu0 %v620
      %v684 = vpop.f32.mrf.mxu0
      %v685 = vadd.f32 %v581, %v684
      %686 = vmatmul.f32.gmra.mxu0 %v623
      %v687 = vpop.f32.mrf.mxu0
      %v688 = vadd.f32 %v581, %v687
      %689 = vmatmul.f32.gmra.mxu0 %v626
      %v690 = vpop.f32.mrf.mxu0
      %v691 = vadd.f32 %v581, %v690
      %692 = vmatmul.f32.gmra.mxu0 %v629
      %v693 = vpop.f32.mrf.mxu0
      %v694 = vadd.f32 %v581, %v693
      %695 = vdwg.mxu0
      %v696 = vld [vmem:[%s5] sm:$0x1]
      %698 = vset.pattern.permute.xlu0 0
      %699 = vperm.xlu0 %698, %v649
      %v700 = vpop.permute.xlu0 %699
      %703 = vset.pattern.permute.xlu0 0
      %704 = vperm.xlu0 %703, %v652
      %v705 = vpop.permute.xlu0 %704
      %708 = vset.pattern.permute.xlu0 0
      %709 = vperm.xlu0 %708, %v655
      %v710 = vpop.permute.xlu0 %709
      %713 = vset.pattern.permute.xlu0 0
      %714 = vperm.xlu0 %713, %v658
      %v715 = vpop.permute.xlu0 %714
      %718 = vset.pattern.permute.xlu0 0
      %719 = vperm.xlu0 %718, %v661
      %v720 = vpop.permute.xlu0 %719
      %723 = vset.pattern.permute.xlu0 0
      %724 = vperm.xlu0 %723, %v664
      %v725 = vpop.permute.xlu0 %724
      %728 = vset.pattern.permute.xlu0 0
      %729 = vperm.xlu0 %728, %v667
      %v730 = vpop.permute.xlu0 %729
      %733 = vset.pattern.permute.xlu0 0
      %734 = vperm.xlu0 %733, %v670
      %v735 = vpop.permute.xlu0 %734
      %738 = vset.pattern.permute.xlu0 0
      %739 = vperm.xlu0 %738, %v673
      %v740 = vpop.permute.xlu0 %739
      %743 = vset.pattern.permute.xlu0 0
      %744 = vperm.xlu0 %743, %v676
      %v745 = vpop.permute.xlu0 %744
      %748 = vset.pattern.permute.xlu0 0
      %749 = vperm.xlu0 %748, %v679
      %v750 = vpop.permute.xlu0 %749
      %753 = vset.pattern.permute.xlu0 0
      %754 = vperm.xlu0 %753, %v682
      %v755 = vpop.permute.xlu0 %754
      %758 = vset.pattern.permute.xlu0 0
      %759 = vperm.xlu0 %758, %v685
      %v760 = vpop.permute.xlu0 %759
      %763 = vset.pattern.permute.xlu0 0
      %764 = vperm.xlu0 %763, %v688
      %v765 = vpop.permute.xlu0 %764
      %768 = vset.pattern.permute.xlu0 0
      %769 = vperm.xlu0 %768, %v691
      %v770 = vpop.permute.xlu0 %769
      %773 = vset.pattern.permute.xlu0 0
      %774 = vperm.xlu0 %773, %v694
      %v775 = vpop.permute.xlu0 %774
      %v778 = vperm.slane %v696, 0
      %v780 = vmul.f32 %v700, %v778
      %v781 = vmul.f32 %v705, %v778
      %v782 = vmul.f32 %v710, %v778
      %v783 = vmul.f32 %v715, %v778
      %v784 = vmul.f32 %v720, %v778
      %v785 = vmul.f32 %v725, %v778
      %v786 = vmul.f32 %v730, %v778
      %v787 = vmul.f32 %v735, %v778
      %v788 = vmul.f32 %v740, %v778
      %v789 = vmul.f32 %v745, %v778
      %v790 = vmul.f32 %v750, %v778
      %v791 = vmul.f32 %v755, %v778
      %v792 = vmul.f32 %v760, %v778
      %v793 = vmul.f32 %v765, %v778
      %v794 = vmul.f32 %v770, %v778
      %v795 = vmul.f32 %v775, %v778
      %v796 = vld [vmem:[%s6] sm:$0x1]
      %v798 = vperm.slane %v796, 0
      %v800 = vadd.f32 %v780, %v798
      %v801 = vadd.f32 %v781, %v798
      %v802 = vadd.f32 %v782, %v798
      %v803 = vadd.f32 %v783, %v798
      %v804 = vadd.f32 %v784, %v798
      %v805 = vadd.f32 %v785, %v798
      %v806 = vadd.f32 %v786, %v798
      %v807 = vadd.f32 %v787, %v798
      %v808 = vadd.f32 %v788, %v798
      %v809 = vadd.f32 %v789, %v798
      %v810 = vadd.f32 %v790, %v798
      %v811 = vadd.f32 %v791, %v798
      %v812 = vadd.f32 %v792, %v798
      %v813 = vadd.f32 %v793, %v798
      %v814 = vadd.f32 %v794, %v798
      %v815 = vadd.f32 %v795, %v798
      %v816 = vtanh.pop %v800
      %v817 = vtanh.pop %v801
      %v818 = vtanh.pop %v802
      %v819 = vtanh.pop %v803
      %v820 = vtanh.pop %v804
      %v821 = vtanh.pop %v805
      %v822 = vtanh.pop %v806
      %v823 = vtanh.pop %v807
      %v824 = vtanh.pop %v808
      %v825 = vtanh.pop %v809
      %v826 = vtanh.pop %v810
      %v827 = vtanh.pop %v811
      %v828 = vtanh.pop %v812
      %v829 = vtanh.pop %v813
      %v830 = vtanh.pop %v814
      %v831 = vtanh.pop %v815
      %v832 = vld [vmem:[%s7] sm:$0xff]
      %v833 = vld [vmem:[%s7 + $0x8] sm:$0xff]
      %v834 = vld [vmem:[%s7 + $0x10] sm:$0xff]
      %v835 = vld [vmem:[%s7 + $0x18] sm:$0xff]
      %v836 = vld [vmem:[%s8] sm:$0x1]
      %v838 = vperm.slane %v836, 0
      %v841 = vsel %vm582, %v816, 0
      %v844 = vsel %vm582, %v817, 0
      %v847 = vsel %vm582, %v818, 0
      %v850 = vsel %vm582, %v819, 0
      %v853 = vsel %vm582, %v820, 0
      %v856 = vsel %vm582, %v821, 0
      %v859 = vsel %vm582, %v822, 0
      %v862 = vsel %vm582, %v823, 0
      %v865 = vsel %vm582, %v824, 0
      %v868 = vsel %vm582, %v825, 0
      %v871 = vsel %vm582, %v826, 0
      %v874 = vsel %vm582, %v827, 0
      %v877 = vsel %vm582, %v828, 0
      %v880 = vsel %vm582, %v829, 0
      %v883 = vsel %vm582, %v830, 0
      %v886 = vsel %vm582, %v831, 0
      %888 = vmatpush.msra.mxu0 0.0
      %889 = vmatpush.msra.mxu0 0.0
      %890 = vmatpush.msra.mxu0 0.0
      %891 = vmatpush.msra.mxu0 0.0
      %892 = vmatpush.msra.mxu0 0.0
      %893 = vmatpush.msra.mxu0 0.0
      %894 = vmatpush.msra.mxu0 0.0
      %895 = vmatpush.msra.mxu0 0.0
      %896 = vmatpush.msra.mxu0 0.0
      %897 = vmatpush.msra.mxu0 0.0
      %898 = vmatpush.msra.mxu0 0.0
      %899 = vmatpush.msra.mxu0 0.0
      %900 = vmatpush.msra.mxu0 %v835
      %901 = vmatpush.msra.mxu0 %v834
      %902 = vmatpush.msra.mxu0 %v833
      %903 = vmatpush.msra.mxu0 %v832
      %904 = vmatmul.f32.gmra.mxu0 %v841
      %v905 = vpop.f32.mrf.mxu0
      %v906 = vadd.f32 %v838, %v905
      %907 = vmatmul.f32.gmra.mxu0 %v844
      %v908 = vpop.f32.mrf.mxu0
      %v909 = vadd.f32 %v838, %v908
      %910 = vmatmul.f32.gmra.mxu0 %v847
      %v911 = vpop.f32.mrf.mxu0
      %v912 = vadd.f32 %v838, %v911
      %913 = vmatmul.f32.gmra.mxu0 %v850
      %v914 = vpop.f32.mrf.mxu0
      %v915 = vadd.f32 %v838, %v914
      %916 = vmatmul.f32.gmra.mxu0 %v853
      %v917 = vpop.f32.mrf.mxu0
      %v918 = vadd.f32 %v838, %v917
      %919 = vmatmul.f32.gmra.mxu0 %v856
      %v920 = vpop.f32.mrf.mxu0
      %v921 = vadd.f32 %v838, %v920
      %922 = vmatmul.f32.gmra.mxu0 %v859
      %v923 = vpop.f32.mrf.mxu0
      %v924 = vadd.f32 %v838, %v923
      %925 = vmatmul.f32.gmra.mxu0 %v862
      %v926 = vpop.f32.mrf.mxu0
      %v927 = vadd.f32 %v838, %v926
      %928 = vmatmul.f32.gmra.mxu0 %v865
      %v929 = vpop.f32.mrf.mxu0
      %v930 = vadd.f32 %v838, %v929
      %931 = vmatmul.f32.gmra.mxu0 %v868
      %v932 = vpop.f32.mrf.mxu0
      %v933 = vadd.f32 %v838, %v932
      %934 = vmatmul.f32.gmra.mxu0 %v871
      %v935 = vpop.f32.mrf.mxu0
      %v936 = vadd.f32 %v838, %v935
      %937 = vmatmul.f32.gmra.mxu0 %v874
      %v938 = vpop.f32.mrf.mxu0
      %v939 = vadd.f32 %v838, %v938
      %940 = vmatmul.f32.gmra.mxu0 %v877
      %v941 = vpop.f32.mrf.mxu0
      %v942 = vadd.f32 %v838, %v941
      %943 = vmatmul.f32.gmra.mxu0 %v880
      %v944 = vpop.f32.mrf.mxu0
      %v945 = vadd.f32 %v838, %v944
      %946 = vmatmul.f32.gmra.mxu0 %v883
      %v947 = vpop.f32.mrf.mxu0
      %v948 = vadd.f32 %v838, %v947
      %949 = vmatmul.f32.gmra.mxu0 %v886
      %v950 = vpop.f32.mrf.mxu0
      %v951 = vadd.f32 %v838, %v950
      %952 = vdwg.mxu0
      %953 = vst.msk [vmem:[%s404] sm:$0xff] %vm582, %v560
      %954 = vst.msk [vmem:[%s404 + $0x8] sm:$0xff] %vm582, %v561
      %955 = vst.msk [vmem:[%s404 + $0x10] sm:$0xff] %vm582, %v562
      %956 = vst.msk [vmem:[%s404 + $0x18] sm:$0xff] %vm582, %v563
      %957 = vst.msk [vmem:[%s404 + $0x20] sm:$0xff] %vm582, %v564
      %958 = vst.msk [vmem:[%s404 + $0x28] sm:$0xff] %vm582, %v565
      %959 = vst.msk [vmem:[%s404 + $0x30] sm:$0xff] %vm582, %v566
      %960 = vst.msk [vmem:[%s404 + $0x38] sm:$0xff] %vm582, %v567
      %961 = vst.msk [vmem:[%s404 + $0x40] sm:$0xff] %vm582, %v568
      %962 = vst.msk [vmem:[%s404 + $0x48] sm:$0xff] %vm582, %v569
      %963 = vst.msk [vmem:[%s404 + $0x50] sm:$0xff] %vm582, %v570
      %964 = vst.msk [vmem:[%s404 + $0x58] sm:$0xff] %vm582, %v571
      %965 = vst.msk [vmem:[%s404 + $0x60] sm:$0xff] %vm582, %v572
      %966 = vst.msk [vmem:[%s404 + $0x68] sm:$0xff] %vm582, %v573
      %967 = vst.msk [vmem:[%s404 + $0x70] sm:$0xff] %vm582, %v574
      %968 = vst.msk [vmem:[%s404 + $0x78] sm:$0xff] %vm582, %v575
      %vm969 = vcmask 7168
      %970 = vst.msk [vmem:[%s410] sm:$0xff] %vm969, %v649
      %971 = vst.msk [vmem:[%s410 + $0x8] sm:$0xff] %vm969, %v652
      %972 = vst.msk [vmem:[%s410 + $0x10] sm:$0xff] %vm969, %v655
      %973 = vst.msk [vmem:[%s410 + $0x18] sm:$0xff] %vm969, %v658
      %974 = vst.msk [vmem:[%s410 + $0x20] sm:$0xff] %vm969, %v661
      %975 = vst.msk [vmem:[%s410 + $0x28] sm:$0xff] %vm969, %v664
      %976 = vst.msk [vmem:[%s410 + $0x30] sm:$0xff] %vm969, %v667
      %977 = vst.msk [vmem:[%s410 + $0x38] sm:$0xff] %vm969, %v670
      %978 = vst.msk [vmem:[%s410 + $0x40] sm:$0xff] %vm969, %v673
      %979 = vst.msk [vmem:[%s410 + $0x48] sm:$0xff] %vm969, %v676
      %980 = vst.msk [vmem:[%s410 + $0x50] sm:$0xff] %vm969, %v679
      %981 = vst.msk [vmem:[%s410 + $0x58] sm:$0xff] %vm969, %v682
      %982 = vst.msk [vmem:[%s410 + $0x60] sm:$0xff] %vm969, %v685
      %983 = vst.msk [vmem:[%s410 + $0x68] sm:$0xff] %vm969, %v688
      %984 = vst.msk [vmem:[%s410 + $0x70] sm:$0xff] %vm969, %v691
      %985 = vst.msk [vmem:[%s410 + $0x78] sm:$0xff] %vm969, %v694
      %986 = vst.msk [vmem:[%s416] sm:$0xff] %vm446, %v906
      %987 = vst.msk [vmem:[%s416 + $0x8] sm:$0xff] %vm446, %v909
      %988 = vst.msk [vmem:[%s416 + $0x10] sm:$0xff] %vm446, %v912
      %989 = vst.msk [vmem:[%s416 + $0x18] sm:$0xff] %vm446, %v915
      %990 = vst.msk [vmem:[%s416 + $0x20] sm:$0xff] %vm446, %v918
      %991 = vst.msk [vmem:[%s416 + $0x28] sm:$0xff] %vm446, %v921
      %992 = vst.msk [vmem:[%s416 + $0x30] sm:$0xff] %vm446, %v924
      %993 = vst.msk [vmem:[%s416 + $0x38] sm:$0xff] %vm446, %v927
      %994 = vst.msk [vmem:[%s416 + $0x40] sm:$0xff] %vm446, %v930
      %995 = vst.msk [vmem:[%s416 + $0x48] sm:$0xff] %vm446, %v933
      %996 = vst.msk [vmem:[%s416 + $0x50] sm:$0xff] %vm446, %v936
      %997 = vst.msk [vmem:[%s416 + $0x58] sm:$0xff] %vm446, %v939
      %998 = vst.msk [vmem:[%s416 + $0x60] sm:$0xff] %vm446, %v942
      %999 = vst.msk [vmem:[%s416 + $0x68] sm:$0xff] %vm446, %v945
      %1000 = vst.msk [vmem:[%s416 + $0x70] sm:$0xff] %vm446, %v948
      %1001 = vst.msk [vmem:[%s416 + $0x78] sm:$0xff] %vm446, %v951
      %s1002 = smul.u32 16, %s24
      %p1003 = scmp.lt.s32.totalorder %s1002, 63
      %s1004 = scalar_select %p1003, %s1002, 63
      %s1005 = smul.addr %s1004, 8
      %s1006 = scalar_lea.vmem %s9, %s1005
      %s1007 = smul.u32 16, %s24
      %p1008 = scmp.lt.s32.totalorder %s1007, 63
      %s1009 = scalar_select %p1008, %s1007, 63
      %s1010 = smul.addr %s1009, 8
      %s1011 = scalar_lea.vmem %s10, %s1010
      %s1012 = smul.u32 16, %s24
      %p1013 = scmp.lt.s32.totalorder %s1012, 63
      %s1014 = scalar_select %p1013, %s1012, 63
      %s1015 = smul.addr %s1014, 8
      %s1016 = scalar_lea.vmem %s11, %s1015
      // Predicated region
      $region57: #{tpu_custom_call.1} parent=55 // pred_check
        %p1017 = pneg %p236
      $region58: #{tpu_custom_call.1} parent=55 // pred_check_branch
        %1019 = sbr.rel (%p1017) target = $region60
      $region59: #{tpu_custom_call.1} parent=55 // pred_region
        %s1020 = smul.u32 16, %s24
      $region60: #{tpu_custom_call.1} parent=55 // pred_fallthru
        _
      // Predicated region
      $region61: #{tpu_custom_call.1} parent=55 // pred_check
        %p1021 = pneg %p262
      $region62: #{tpu_custom_call.1} parent=55 // pred_check_branch
        %1023 = sbr.rel (%p1021) target = $region64
      $region63: #{tpu_custom_call.1} parent=55 // pred_region
        %s1024 = smul.u32 16, %s24
      $region64: #{tpu_custom_call.1} parent=55 // pred_fallthru
        _
      // Predicated region
      $region65: #{tpu_custom_call.1} parent=55 // pred_check
        %p1025 = pneg %p288
      $region66: #{tpu_custom_call.1} parent=55 // pred_check_branch
        %1027 = sbr.rel (%p1025) target = $region68
      $region67: #{tpu_custom_call.1} parent=55 // pred_region
        %s1028 = smul.u32 16, %s24
      $region68: #{tpu_custom_call.1} parent=55 // pred_fallthru
        _
    $region56: #{tpu_custom_call.1} parent=5 // pred_fallthru
      _
    %p1029 = scmp.le.s32.totalorder 2, %s19
    // Predicated region
    $region69: #{tpu_custom_call.1} parent=5 // pred_check
      %p1030 = pneg %p1029
    $region70: #{tpu_custom_call.1} parent=5 // pred_check_branch
      %1032 = sbr.rel (%p1030) target = $region72
    $region71: #{tpu_custom_call.1} parent=5 // pred_region
      %s1033 = ssub.s32 %s19, 2
      // Predicated region
      $region73: #{tpu_custom_call.1} parent=71 // pred_check
        %p1034 = pneg %p242
      $region74: #{tpu_custom_call.1} parent=71 // pred_check_branch
        %1036 = sbr.rel (%p1034) target = $region76
      $region75: #{tpu_custom_call.1} parent=71 // pred_region
        %s1037 = smul.u32 16, %s25
        %p1038 = scmp.lt.s32.totalorder %s1037, 63
        %s1039 = scalar_select %p1038, %s1037, 63
        %s1040 = smul.addr %s1039, 8
        %s1041 = scalar_lea.vmem %s9, %s1040
      $region76: #{tpu_custom_call.1} parent=71 // pred_fallthru
        _
      // Predicated region
      $region77: #{tpu_custom_call.1} parent=71 // pred_check
        %p1042 = pneg %p268
      $region78: #{tpu_custom_call.1} parent=71 // pred_check_branch
        %1044 = sbr.rel (%p1042) target = $region80
      $region79: #{tpu_custom_call.1} parent=71 // pred_region
        %s1045 = smul.u32 16, %s25
        %p1046 = scmp.lt.s32.totalorder %s1045, 63
        %s1047 = scalar_select %p1046, %s1045, 63
        %s1048 = smul.addr %s1047, 8
        %s1049 = scalar_lea.vmem %s10, %s1048
      $region80: #{tpu_custom_call.1} parent=71 // pred_fallthru
        _
      // Predicated region
      $region81: #{tpu_custom_call.1} parent=71 // pred_check
        %p1050 = pneg %p294
      $region82: #{tpu_custom_call.1} parent=71 // pred_check_branch
        %1052 = sbr.rel (%p1050) target = $region84
      $region83: #{tpu_custom_call.1} parent=71 // pred_region
        %s1053 = smul.u32 16, %s25
        %p1054 = scmp.lt.s32.totalorder %s1053, 63
        %s1055 = scalar_select %p1054, %s1053, 63
        %s1056 = smul.addr %s1055, 8
        %s1057 = scalar_lea.vmem %s11, %s1056
      $region84: #{tpu_custom_call.1} parent=71 // pred_fallthru
        _
    $region72: #{tpu_custom_call.1} parent=5 // pred_fallthru
      _
  $region6: #{tpu_custom_call.1} parent=0 // loop_footer
    %s23 = sadd.s32 1, %s19
  $region7: #{tpu_custom_call.1} parent=0 // loop_footer_branch
    %18 = sbr.rel target = $region3
  $region8: #{tpu_custom_call.1} parent=0 // loop_exit
    _

</llo_original>
